<compile_context>
chip_gen: v7x
topology: tpu7x:2x2x1
jax: 0.10.0
libtpu: 0.0.40
codegen_flags: <defaults>
</compile_context>

<pallas_src>
import jax
import jax.numpy as jnp
from jax.experimental import pallas as pl
from jax.experimental.pallas import tpu as pltpu

_MAX_TILE = 8192          # max batch (sublane) tile
_SINGLE_STEP_MAX = 256    # below this, one grid step is cheapest everywhere
_VMEM_LIMIT = 48 * 1024 * 1024  # explicit: > v5e's 16 MiB scoped default,
                                # < v7x's 64 MiB physical VMEM


# ----------------------------- kernels --------------------------------------
# All activations are laid out (batch_tile, features): batch on sublanes.

def _task0_kernel(x_ref, w1t_ref, b1_ref, o_ref):
    h = jnp.dot(x_ref[...], w1t_ref[...], preferred_element_type=jnp.float32)
    o_ref[...] = jnp.maximum(h + b1_ref[...], 0.0).astype(o_ref.dtype)


def _task1_kernel(x_ref, w1t_ref, b1_ref, w2t_ref, b2_ref, wit_ref, bi_ref,
                  o_ref):
    # hidden -> relu                                    (TB, 30)
    h = jnp.dot(x_ref[...], w1t_ref[...], preferred_element_type=jnp.float32)
    h = jnp.maximum(h + b1_ref[...], 0.0)
    # hidden2 -> relu                                   (TB, out)
    h = jnp.dot(h, w2t_ref[...], preferred_element_type=jnp.float32)
    h = jnp.maximum(h + b2_ref[...], 0.0)
    # influenced -> sigmoid                             (TB, out)
    z = jnp.dot(h, wit_ref[...], preferred_element_type=jnp.float32)
    o_ref[...] = jax.nn.sigmoid(z + bi_ref[...]).astype(o_ref.dtype)


def _task2_kernel(x_ref, w1t_ref, b1_ref, w3t_ref, b3_ref, wc_ref, bc_ref,
                  o_ref):
    # hidden -> relu                                    (TB, 30)
    h = jnp.dot(x_ref[...], w1t_ref[...], preferred_element_type=jnp.float32)
    h = jnp.maximum(h + b1_ref[...], 0.0)
    # hidden3 (30 -> 1) -> relu                          (TB, 1)
    z = jnp.dot(h, w3t_ref[...], preferred_element_type=jnp.float32) + b3_ref[0]
    z = jnp.maximum(z, 0.0)
    # cascade (1 -> 1): scalar affine from SMEM scalars
    o_ref[...] = (z * wc_ref[0] + bc_ref[0]).astype(o_ref.dtype)


# ----------------------------- wrapper ---------------------------------------

def _round_up(n, m):
    return -(-n // m) * m


def _pick_tile(B):
    """Batch (sublane) tile.  Single step for tiny B; otherwise >= 2 steps
    (so v7x's second TensorCore gets work), capped at _MAX_TILE, multiple of 8."""
    if B <= _SINGLE_STEP_MAX:
        return B
    half = _round_up(-(-B // 2), 8)
    return min(_MAX_TILE, half)


def _rep_spec(arr):
    # Whole-array VMEM block with a constant index_map: stays resident in
    # VMEM across the batch grid (no per-step re-DMA).
    return pl.BlockSpec(arr.shape, lambda i: (0,) * arr.ndim)


def _smem_spec():
    # Small scalar parameter -> SMEM, no padded VMEM tile / extra DMA.
    return pl.BlockSpec(memory_space=pltpu.MemorySpace.SMEM)


def nn_forward(params, x, task_id):
    """x: (B, input_size) float array. Returns output matching the PyTorch module."""
    B, in_size = x.shape
    dt = x.dtype
    itemsize = jnp.dtype(dt).itemsize

    TB = _pick_tile(B)
    grid = (pl.cdiv(B, TB),)          # ragged last block handled by Pallas masking
    cp = pltpu.CompilerParams(dimension_semantics=("parallel",),
                              vmem_limit_bytes=_VMEM_LIMIT)

    w1, b1 = params["hidden"]                          # (30, in), (30,)
    w1t = w1.T.astype(dt)                              # (in, 30) — tiny one-time copy
    b1r = b1.reshape(1, -1).astype(jnp.float32)        # (1, 30) row bias

    x_spec = pl.BlockSpec((TB, in_size), lambda i: (i, 0))

    if task_id == 1:
        w2, b2 = params["hidden2"]                     # (out, 30), (out,)
        wi, bi = params["influenced"]                  # (out, out), (out,)
        out_dim = w2.shape[0]
        w2t = w2.T.astype(jnp.float32)                 # (30, out)
        b2r = b2.reshape(1, -1).astype(jnp.float32)
        wit = wi.T.astype(jnp.float32)                 # (out, out)
        bir = bi.reshape(1, -1).astype(jnp.float32)
        flops = 2 * B * (in_size * 30 + 30 * out_dim + out_dim * out_dim)
        bytes_acc = (B * in_size * itemsize + B * out_dim * itemsize
                     + 4 * (w1.size + w2.size + wi.size + 30 + 2 * out_dim))
        return pl.pallas_call(
            _task1_kernel,
            out_shape=jax.ShapeDtypeStruct((B, out_dim), dt),
            grid=grid,
            in_specs=[x_spec, _rep_spec(w1t), _rep_spec(b1r),
                      _rep_spec(w2t), _rep_spec(b2r),
                      _rep_spec(wit), _rep_spec(bir)],
            out_specs=pl.BlockSpec((TB, out_dim), lambda i: (i, 0)),
            compiler_params=cp,
            cost_estimate=pl.CostEstimate(flops=flops,
                                          transcendentals=B * out_dim,
                                          bytes_accessed=bytes_acc),
        )(x, w1t, b1r, w2t, b2r, wit, bir)

    if task_id == 2:
        w3, b3 = params["hidden3"]                     # (1, 30), (1,)
        wc, bc = params["cascade"]                     # (1, 1),  (1,)
        w3t = w3.T.astype(jnp.float32)                 # (30, 1)
        b3s = b3.reshape(1).astype(jnp.float32)
        wcs = wc.reshape(1).astype(jnp.float32)
        bcs = bc.reshape(1).astype(jnp.float32)
        flops = 2 * B * (in_size * 30 + 30) + 4 * B
        bytes_acc = (B * in_size * itemsize + B * itemsize
                     + 4 * (w1.size + 30 + 30 + 3))
        return pl.pallas_call(
            _task2_kernel,
            out_shape=jax.ShapeDtypeStruct((B, 1), dt),
            grid=grid,
            in_specs=[x_spec, _rep_spec(w1t), _rep_spec(b1r), _rep_spec(w3t),
                      _smem_spec(), _smem_spec(), _smem_spec()],
            out_specs=pl.BlockSpec((TB, 1), lambda i: (i, 0)),
            compiler_params=cp,
            cost_estimate=pl.CostEstimate(flops=flops, transcendentals=0,
                                          bytes_accessed=bytes_acc),
        )(x, w1t, b1r, w3t, b3s, wcs, bcs)

    # Any other task_id: only hidden + relu (matches PyTorch fallthrough).
    flops = 2 * B * in_size * 30 + 2 * B * 30
    bytes_acc = (B * in_size * itemsize + B * 30 * itemsize
                 + 4 * (w1.size + 30))
    return pl.pallas_call(
        _task0_kernel,
        out_shape=jax.ShapeDtypeStruct((B, 30), dt),
        grid=grid,
        in_specs=[x_spec, _rep_spec(w1t), _rep_spec(b1r)],
        out_specs=pl.BlockSpec((TB, 30), lambda i: (i, 0)),
        compiler_params=cp,
        cost_estimate=pl.CostEstimate(flops=flops, transcendentals=0,
                                      bytes_accessed=bytes_acc),
    )(x, w1t, b1r)


# ----------------------------- params / reference ----------------------------

def init_params(key, input_size, output_size):
    """Deterministic init mirroring nn.Linear default (U(-1/sqrt(fan_in), +))
    and the constant init of `hidden3` (weight=1, bias=0).
    Weights stored in PyTorch layout: (out_features, in_features)."""
    ks = jax.random.split(key, 8)

    def linear(kw, kb, fan_in, fan_out):
        bound = 1.0 / (fan_in ** 0.5)
        w = jax.random.uniform(kw, (fan_out, fan_in), jnp.float32, -bound, bound)
        b = jax.random.uniform(kb, (fan_out,), jnp.float32, -bound, bound)
        return w, b

    return {
        "hidden": linear(ks[0], ks[1], input_size, 30),
        "hidden2": linear(ks[2], ks[3], 30, output_size),
        # hidden3: nn.init.constant_(weight, 1), constant_(bias, 0)
        "hidden3": (jnp.ones((1, 30), jnp.float32), jnp.zeros((1,), jnp.float32)),
        "influenced": linear(ks[4], ks[5], output_size, output_size),
        "cascade": linear(ks[6], ks[7], 1, 1),
    }


def _reference(params, x, task_id):
    w1, b1 = params["hidden"]
    h = jnp.maximum(x @ w1.T + b1, 0.0)
    if task_id == 1:
        w2, b2 = params["hidden2"]
        wi, bi = params["influenced"]
        h = jnp.maximum(h @ w2.T + b2, 0.0)
        return jax.nn.sigmoid(h @ wi.T + bi)
    if task_id == 2:
        w3, b3 = params["hidden3"]
        wc, bc = params["cascade"]
        z = jnp.maximum(h @ w3.T + b3, 0.0)
        return z @ wc.T + bc
    return h


if __name__ == "__main__":
    input_size, output_size, batch = 16, 4, 16
    key = jax.random.PRNGKey(0)
    k_params, k_x = jax.random.split(key)
    params = init_params(k_params, input_size, output_size)
    x = jax.random.normal(k_x, (batch, input_size), dtype=jnp.float32)

    out1 = jax.block_until_ready(nn_forward(params, x, task_id=1))
    out2 = jax.block_until_ready(nn_forward(params, x, task_id=2))
    out0 = jax.block_until_ready(nn_forward(params, x, task_id=0))

    assert out1.shape == (batch, output_size)
    assert out2.shape == (batch, 1)
    assert out0.shape == (batch, 30)
    assert jnp.allclose(out1, _reference(params, x, 1), atol=1e-5)
    assert jnp.allclose(out2, _reference(params, x, 2), atol=1e-5)
    assert jnp.allclose(out0, _reference(params, x, 0), atol=1e-5)

    print("KERNEL_OK")
</pallas_src>

<mosaic_0001>
module attributes {stable_mosaic.version = 11 : i64} {
  func.func @_task1_kernel(%arg0: i32, %arg1: memref<16x16xf32, #tpu.memory_space<vmem>>, %arg2: memref<16x30xf32, #tpu.memory_space<vmem>>, %arg3: memref<1x30xf32, #tpu.memory_space<vmem>>, %arg4: memref<30x4xf32, #tpu.memory_space<vmem>>, %arg5: memref<1x4xf32, #tpu.memory_space<vmem>>, %arg6: memref<4x4xf32, #tpu.memory_space<vmem>>, %arg7: memref<1x4xf32, #tpu.memory_space<vmem>>, %arg8: memref<16x4xf32, #tpu.memory_space<vmem>>) attributes {dimension_semantics = [#tpu.dimension_semantics<parallel>], iteration_bounds = array<i64: 1>, scalar_prefetch = 0 : i64, scratch_operands = 0 : i64, tpu.core_type = #tpu.core_type<tc>, window_params = [{transform_indices = @transform_0, window_bounds = array<i64: 16, 16>}, {pipeline_mode = #tpu.pipeline_mode<synchronous>, transform_indices = @transform_1, window_bounds = array<i64: 16, 30>}, {pipeline_mode = #tpu.pipeline_mode<synchronous>, transform_indices = @transform_2, window_bounds = array<i64: 1, 30>}, {pipeline_mode = #tpu.pipeline_mode<synchronous>, transform_indices = @transform_3, window_bounds = array<i64: 30, 4>}, {pipeline_mode = #tpu.pipeline_mode<synchronous>, transform_indices = @transform_4, window_bounds = array<i64: 1, 4>}, {pipeline_mode = #tpu.pipeline_mode<synchronous>, transform_indices = @transform_5, window_bounds = array<i64: 4, 4>}, {pipeline_mode = #tpu.pipeline_mode<synchronous>, transform_indices = @transform_6, window_bounds = array<i64: 1, 4>}, {transform_indices = @transform_7, window_bounds = array<i64: 16, 4>}]} {
    %c0 = arith.constant 0 : index
    %c0_0 = arith.constant 0 : index
    %0 = vector.load %arg1[%c0, %c0_0] : memref<16x16xf32, #tpu.memory_space<vmem>>, vector<16x16xf32>
    %c0_1 = arith.constant 0 : index
    %c0_2 = arith.constant 0 : index
    %1 = vector.load %arg2[%c0_1, %c0_2] : memref<16x30xf32, #tpu.memory_space<vmem>>, vector<16x30xf32>
    %cst = arith.constant dense<0.000000e+00> : vector<16x30xf32>
    %2 = tpu.matmul %0, %1, %cst {dimension_numbers = #tpu.dot_dimension_numbers<[1], [0], [0], [1], [0, 0, 1, 1], [], []>} : vector<16x16xf32>, vector<16x30xf32>, vector<16x30xf32> -> vector<16x30xf32>
    %c0_3 = arith.constant 0 : index
    %c0_4 = arith.constant 0 : index
    %3 = vector.load %arg3[%c0_3, %c0_4] : memref<1x30xf32, #tpu.memory_space<vmem>>, vector<1x30xf32>
    %4 = vector.broadcast %3 : vector<1x30xf32> to vector<16x30xf32>
    %5 = arith.addf %2, %4 : vector<16x30xf32>
    %cst_5 = arith.constant 0.000000e+00 : f32
    %6 = vector.broadcast %cst_5 : f32 to vector<16x30xf32>
    %7 = arith.maximumf %5, %6 : vector<16x30xf32>
    %c0_6 = arith.constant 0 : index
    %c0_7 = arith.constant 0 : index
    %8 = vector.load %arg4[%c0_6, %c0_7] : memref<30x4xf32, #tpu.memory_space<vmem>>, vector<30x4xf32>
    %cst_8 = arith.constant dense<0.000000e+00> : vector<16x4xf32>
    %9 = tpu.matmul %7, %8, %cst_8 {dimension_numbers = #tpu.dot_dimension_numbers<[1], [0], [0], [1], [0, 0, 1, 1], [], []>} : vector<16x30xf32>, vector<30x4xf32>, vector<16x4xf32> -> vector<16x4xf32>
    %c0_9 = arith.constant 0 : index
    %c0_10 = arith.constant 0 : index
    %10 = vector.load %arg5[%c0_9, %c0_10] : memref<1x4xf32, #tpu.memory_space<vmem>>, vector<1x4xf32>
    %11 = vector.broadcast %10 : vector<1x4xf32> to vector<16x4xf32>
    %12 = arith.addf %9, %11 : vector<16x4xf32>
    %cst_11 = arith.constant 0.000000e+00 : f32
    %13 = vector.broadcast %cst_11 : f32 to vector<16x4xf32>
    %14 = arith.maximumf %12, %13 : vector<16x4xf32>
    %c0_12 = arith.constant 0 : index
    %c0_13 = arith.constant 0 : index
    %15 = vector.load %arg6[%c0_12, %c0_13] : memref<4x4xf32, #tpu.memory_space<vmem>>, vector<4x4xf32>
    %cst_14 = arith.constant dense<0.000000e+00> : vector<16x4xf32>
    %16 = tpu.matmul %14, %15, %cst_14 {dimension_numbers = #tpu.dot_dimension_numbers<[1], [0], [0], [1], [0, 0, 1, 1], [], []>} : vector<16x4xf32>, vector<4x4xf32>, vector<16x4xf32> -> vector<16x4xf32>
    %c0_15 = arith.constant 0 : index
    %c0_16 = arith.constant 0 : index
    %17 = vector.load %arg7[%c0_15, %c0_16] : memref<1x4xf32, #tpu.memory_space<vmem>>, vector<1x4xf32>
    %18 = vector.broadcast %17 : vector<1x4xf32> to vector<16x4xf32>
    %19 = arith.addf %16, %18 : vector<16x4xf32>
    %20 = arith.negf %19 : vector<16x4xf32>
    %21 = math.exp %20 : vector<16x4xf32>
    %cst_17 = arith.constant 1.000000e+00 : f32
    %22 = vector.broadcast %cst_17 : f32 to vector<16x4xf32>
    %23 = arith.addf %22, %21 : vector<16x4xf32>
    %24 = arith.divf %22, %23 : vector<16x4xf32>
    %c0_18 = arith.constant 0 : index
    %c0_19 = arith.constant 0 : index
    %25 = vector.load %arg8[%c0_18, %c0_19] : memref<16x4xf32, #tpu.memory_space<vmem>>, vector<16x4xf32>
    tpu.vector_store %arg8[%c0_18, %c0_19], %24 {strides = array<i32>} : memref<16x4xf32, #tpu.memory_space<vmem>>, vector<16x4xf32>,
    return
  }
  func.func @transform_0(%arg0: i32) -> (i32, i32) {
    %c0_i32 = arith.constant 0 : i32
    %c0_i32_0 = arith.constant 0 : i32
    return %arg0, %c0_i32 : i32, i32
  }
  func.func @transform_1(%arg0: i32) -> (i32, i32) {
    %c0_i32 = arith.constant 0 : i32
    %c0_i32_0 = arith.constant 0 : i32
    %c0_i32_1 = arith.constant 0 : i32
    return %c0_i32, %c0_i32_0 : i32, i32
  }
  func.func @transform_2(%arg0: i32) -> (i32, i32) {
    %c0_i32 = arith.constant 0 : i32
    %c0_i32_0 = arith.constant 0 : i32
    %c0_i32_1 = arith.constant 0 : i32
    return %c0_i32, %c0_i32_0 : i32, i32
  }
  func.func @transform_3(%arg0: i32) -> (i32, i32) {
    %c0_i32 = arith.constant 0 : i32
    %c0_i32_0 = arith.constant 0 : i32
    %c0_i32_1 = arith.constant 0 : i32
    return %c0_i32, %c0_i32_0 : i32, i32
  }
  func.func @transform_4(%arg0: i32) -> (i32, i32) {
    %c0_i32 = arith.constant 0 : i32
    %c0_i32_0 = arith.constant 0 : i32
    %c0_i32_1 = arith.constant 0 : i32
    return %c0_i32, %c0_i32_0 : i32, i32
  }
  func.func @transform_5(%arg0: i32) -> (i32, i32) {
    %c0_i32 = arith.constant 0 : i32
    %c0_i32_0 = arith.constant 0 : i32
    %c0_i32_1 = arith.constant 0 : i32
    return %c0_i32, %c0_i32_0 : i32, i32
  }
  func.func @transform_6(%arg0: i32) -> (i32, i32) {
    %c0_i32 = arith.constant 0 : i32
    %c0_i32_0 = arith.constant 0 : i32
    %c0_i32_1 = arith.constant 0 : i32
    return %c0_i32, %c0_i32_0 : i32, i32
  }
  func.func @transform_7(%arg0: i32) -> (i32, i32) {
    %c0_i32 = arith.constant 0 : i32
    %c0_i32_0 = arith.constant 0 : i32
    return %arg0, %c0_i32 : i32, i32
  }
}

</mosaic_0001>

<llo_original>
// kernel: tpu_custom_call.1
$region0: #{tpu_custom_call.1}
  #allocation0 [shape = 'u32[]', space=smem, size = 0x4, offset = 0x4, fixed_abs, tag = 'smem constant byte address 0x4 - core index']
  #allocation1 [shape = 'u32[144,128]{1,0:T(1,128)}', space=vmem, size = 0x12000, scoped, tag = 'internal scratch']
  %s0 = inlined_call_operand.vmem [shape: f32[16,16], index: 0, kind: input, shape index: {}]
  %s1 = inlined_call_operand.vmem [shape: f32[16,30], index: 1, kind: input, shape index: {}]
  %s2 = inlined_call_operand.vmem [shape: f32[1,30], index: 2, kind: input, shape index: {}]
  %s3 = inlined_call_operand.vmem [shape: f32[30,4], index: 3, kind: input, shape index: {}]
  %s4 = inlined_call_operand.vmem [shape: f32[1,4], index: 4, kind: input, shape index: {}]
  %s5 = inlined_call_operand.vmem [shape: f32[4,4], index: 5, kind: input, shape index: {}]
  %s6 = inlined_call_operand.vmem [shape: f32[1,4], index: 6, kind: input, shape index: {}]
  %s7 = inlined_call_operand.vmem [shape: f32[16,4], index: 7, kind: output, shape index: {}]
  %s8 = sld [smem:[#allocation0]]
  $region38: #{tpu_custom_call.1} parent=0
    _
  %s10 = ssub.s32 1, %s8
  %s11 = scalar_select 0, %s10, %s8
  // Predicated region
  $region2: #{tpu_custom_call.1} parent=0 // pred_check
    _
  $region3: #{tpu_custom_call.1} parent=0 // pred_check_branch
    %13 = sbr.rel (0) target = $region5
  $region4: #{tpu_custom_call.1} parent=0 // pred_region
    _
  $region5: #{tpu_custom_call.1} parent=0 // pred_fallthru
    _
  // Predicated region
  $region6: #{tpu_custom_call.1} parent=0 // pred_check
    _
  $region7: #{tpu_custom_call.1} parent=0 // pred_check_branch
    %15 = sbr.rel (0) target = $region9
  $region8: #{tpu_custom_call.1} parent=0 // pred_region
    _
  $region9: #{tpu_custom_call.1} parent=0 // pred_fallthru
    _
  // Predicated region
  $region10: #{tpu_custom_call.1} parent=0 // pred_check
    _
  $region11: #{tpu_custom_call.1} parent=0 // pred_check_branch
    %17 = sbr.rel (0) target = $region13
  $region12: #{tpu_custom_call.1} parent=0 // pred_region
    _
  $region13: #{tpu_custom_call.1} parent=0 // pred_fallthru
    _
  // Predicated region
  $region14: #{tpu_custom_call.1} parent=0 // pred_check
    _
  $region15: #{tpu_custom_call.1} parent=0 // pred_check_branch
    %19 = sbr.rel (0) target = $region17
  $region16: #{tpu_custom_call.1} parent=0 // pred_region
    _
  $region17: #{tpu_custom_call.1} parent=0 // pred_fallthru
    _
  // Predicated region
  $region18: #{tpu_custom_call.1} parent=0 // pred_check
    _
  $region19: #{tpu_custom_call.1} parent=0 // pred_check_branch
    %21 = sbr.rel (0) target = $region21
  $region20: #{tpu_custom_call.1} parent=0 // pred_region
    _
  $region21: #{tpu_custom_call.1} parent=0 // pred_fallthru
    _
  // Predicated region
  $region22: #{tpu_custom_call.1} parent=0 // pred_check
    _
  $region23: #{tpu_custom_call.1} parent=0 // pred_check_branch
    %23 = sbr.rel (0) target = $region25
  $region24: #{tpu_custom_call.1} parent=0 // pred_region
    _
  $region25: #{tpu_custom_call.1} parent=0 // pred_fallthru
    _
  // Predicated region
  $region26: #{tpu_custom_call.1} parent=0 // pred_check
    _
  $region27: #{tpu_custom_call.1} parent=0 // pred_check_branch
    %25 = sbr.rel (0) target = $region29
  $region28: #{tpu_custom_call.1} parent=0 // pred_region
    _
  $region29: #{tpu_custom_call.1} parent=0 // pred_fallthru
    _
  %v26 = vld [vmem:[%s0] sm:$0xff]
  %v27 = vld [vmem:[%s0 + $0x8] sm:$0xff]
  %v28 = vld [vmem:[%s1] sm:$0xff]
  %v29 = vld [vmem:[%s1 + $0x8] sm:$0xff]
  %v30 = vld [vmem:[%s2] sm:$0x1]
  %v32 = vlaneseq
  %v33 = vshrl.u32 %v32, 7
  %v34 = vsub.s32 0, %v33
  %v35 = vrot.slane %v30, %v34
  %vm37 = vcmask 130048
  %v39 = vsel %vm37, %v26, 0
  %v42 = vsel %vm37, %v27, 0
  %44 = vmatprep.subr.mxu0 0.0
  %45 = vmatpush1.msra.mxu0 %v28
  %46 = vmatprep.subr.mxu0 0.0
  %47 = vmatpush1.msra.mxu0 %v29
  %48 = vmatprep.subr.mxu0 0.0
  %49 = vmatpush1.msra.mxu0 0.0
  %50 = vmatprep.subr.mxu0 0.0
  %51 = vmatpush1.msra.mxu0 0.0
  %52 = vmatprep.subr.mxu0 0.0
  %53 = vmatpush1.msra.mxu0 0.0
  %54 = vmatprep.subr.mxu0 0.0
  %55 = vmatpush1.msra.mxu0 0.0
  %56 = vmatprep.subr.mxu0 0.0
  %57 = vmatpush1.msra.mxu0 0.0
  %58 = vmatprep.subr.mxu0 0.0
  %59 = vmatpush1.msra.mxu0 0.0
  %60 = vmatprep.subr.mxu0 0.0
  %61 = vmatpush1.msra.mxu0 0.0
  %62 = vmatprep.subr.mxu0 0.0
  %63 = vmatpush1.msra.mxu0 0.0
  %64 = vmatprep.subr.mxu0 0.0
  %65 = vmatpush1.msra.mxu0 0.0
  %66 = vmatprep.subr.mxu0 0.0
  %67 = vmatpush1.msra.mxu0 0.0
  %68 = vmatprep.subr.mxu0 0.0
  %69 = vmatpush1.msra.mxu0 0.0
  %70 = vmatprep.subr.mxu0 0.0
  %71 = vmatpush1.msra.mxu0 0.0
  %72 = vmatprep.subr.mxu0 0.0
  %73 = vmatpush1.msra.mxu0 0.0
  %74 = vmatprep.subr.mxu0 0.0
  %75 = vmatpush1.msra.mxu0 0.0
  %76 = vmatprep.subr.mxu0 0.0
  %77 = vmatpush1.msra.mxu0 0.0
  %78 = vmatprep.subr.mxu0 0.0
  %79 = vmatpush1.msra.mxu0 0.0
  %80 = vmatprep.subr.mxu0 0.0
  %81 = vmatpush1.msra.mxu0 0.0
  %82 = vmatprep.subr.mxu0 0.0
  %83 = vmatpush1.msra.mxu0 0.0
  %84 = vmatprep.subr.mxu0 0.0
  %85 = vmatpush1.msra.mxu0 0.0
  %86 = vmatprep.subr.mxu0 0.0
  %87 = vmatpush1.msra.mxu0 0.0
  %88 = vmatprep.subr.mxu0 0.0
  %89 = vmatpush1.msra.mxu0 0.0
  %90 = vmatprep.subr.mxu0 0.0
  %91 = vmatpush1.msra.mxu0 0.0
  %92 = vmatprep.subr.mxu0 0.0
  %93 = vmatpush1.msra.mxu0 0.0
  %94 = vmatprep.subr.mxu0 0.0
  %95 = vmatpush1.msra.mxu0 0.0
  %96 = vmatprep.subr.mxu0 0.0
  %97 = vmatpush1.msra.mxu0 0.0
  %98 = vmatprep.subr.mxu0 0.0
  %99 = vmatpush1.msra.mxu0 0.0
  %100 = vmatprep.subr.mxu0 0.0
  %101 = vmatpush1.msra.mxu0 0.0
  %102 = vmatprep.subr.mxu0 0.0
  %103 = vmatpush1.msra.mxu0 0.0
  %104 = vmatprep.subr.mxu0 0.0
  %105 = vmatpush1.msra.mxu0 0.0
  %106 = vmatprep.subr.mxu0 0.0
  %107 = vmatpush1.msra.mxu0 0.0
  %108 = vmatprep.mubr.f32.mxu0 0.0
  %109 = vmatmul.mubr.f32.gmra.mrb[0].mxu0 %v39
  %v110 = vpop.f32.mrb[0].mxu0
  %v111 = vadd.f32 %v35, %v110
  %v112 = vpop.f32.mrb[0].mxu0
  %113 = vmatprep.mubr.f32.mxu0 0.0
  %114 = vmatmul.mubr.f32.gmra.mrb[0].mxu0 %v42
  %v115 = vpop.f32.mrb[0].mxu0
  %v116 = vadd.f32 %v35, %v115
  %v117 = vpop.f32.mrb[0].mxu0
  %118 = vdwg.mxu0
  %v119 = vmax.f32 %v111, 0.0
  %v120 = vmax.f32 %v116, 0.0
  %v121 = vld [vmem:[%s3] sm:$0xff]
  %v122 = vld [vmem:[%s3 + $0x8] sm:$0xff]
  %v123 = vld [vmem:[%s3 + $0x10] sm:$0xff]
  %v124 = vld [vmem:[%s3 + $0x18] sm:$0x3f]
  %v125 = vld [vmem:[%s4] sm:$0x1]
  %v127 = vlaneseq
  %v128 = vshrl.u32 %v127, 7
  %v129 = vsub.s32 0, %v128
  %v130 = vrot.slane %v125, %v129
  %vm132 = vcmask 244736
  %v134 = vsel %vm132, %v119, 0
  %v137 = vsel %vm132, %v120, 0
  %vm139 = vcmask 1045504
  %v141 = vsel %vm139, %v124, 0
  %143 = vmatprep.subr.mxu0 0.0
  %144 = vmatpush1.msra.mxu0 %v121
  %145 = vmatprep.subr.mxu0 0.0
  %146 = vmatpush1.msra.mxu0 %v122
  %147 = vmatprep.subr.mxu0 0.0
  %148 = vmatpush1.msra.mxu0 %v123
  %149 = vmatprep.subr.mxu0 0.0
  %150 = vmatpush1.msra.mxu0 %v141
  %151 = vmatprep.subr.mxu0 0.0
  %152 = vmatpush1.msra.mxu0 0.0
  %153 = vmatprep.subr.mxu0 0.0
  %154 = vmatpush1.msra.mxu0 0.0
  %155 = vmatprep.subr.mxu0 0.0
  %156 = vmatpush1.msra.mxu0 0.0
  %157 = vmatprep.subr.mxu0 0.0
  %158 = vmatpush1.msra.mxu0 0.0
  %159 = vmatprep.subr.mxu0 0.0
  %160 = vmatpush1.msra.mxu0 0.0
  %161 = vmatprep.subr.mxu0 0.0
  %162 = vmatpush1.msra.mxu0 0.0
  %163 = vmatprep.subr.mxu0 0.0
  %164 = vmatpush1.msra.mxu0 0.0
  %165 = vmatprep.subr.mxu0 0.0
  %166 = vmatpush1.msra.mxu0 0.0
  %167 = vmatprep.subr.mxu0 0.0
  %168 = vmatpush1.msra.mxu0 0.0
  %169 = vmatprep.subr.mxu0 0.0
  %170 = vmatpush1.msra.mxu0 0.0
  %171 = vmatprep.subr.mxu0 0.0
  %172 = vmatpush1.msra.mxu0 0.0
  %173 = vmatprep.subr.mxu0 0.0
  %174 = vmatpush1.msra.mxu0 0.0
  %175 = vmatprep.subr.mxu0 0.0
  %176 = vmatpush1.msra.mxu0 0.0
  %177 = vmatprep.subr.mxu0 0.0
  %178 = vmatpush1.msra.mxu0 0.0
  %179 = vmatprep.subr.mxu0 0.0
  %180 = vmatpush1.msra.mxu0 0.0
  %181 = vmatprep.subr.mxu0 0.0
  %182 = vmatpush1.msra.mxu0 0.0
  %183 = vmatprep.subr.mxu0 0.0
  %184 = vmatpush1.msra.mxu0 0.0
  %185 = vmatprep.subr.mxu0 0.0
  %186 = vmatpush1.msra.mxu0 0.0
  %187 = vmatprep.subr.mxu0 0.0
  %188 = vmatpush1.msra.mxu0 0.0
  %189 = vmatprep.subr.mxu0 0.0
  %190 = vmatpush1.msra.mxu0 0.0
  %191 = vmatprep.subr.mxu0 0.0
  %192 = vmatpush1.msra.mxu0 0.0
  %193 = vmatprep.subr.mxu0 0.0
  %194 = vmatpush1.msra.mxu0 0.0
  %195 = vmatprep.subr.mxu0 0.0
  %196 = vmatpush1.msra.mxu0 0.0
  %197 = vmatprep.subr.mxu0 0.0
  %198 = vmatpush1.msra.mxu0 0.0
  %199 = vmatprep.subr.mxu0 0.0
  %200 = vmatpush1.msra.mxu0 0.0
  %201 = vmatprep.subr.mxu0 0.0
  %202 = vmatpush1.msra.mxu0 0.0
  %203 = vmatprep.subr.mxu0 0.0
  %204 = vmatpush1.msra.mxu0 0.0
  %205 = vmatprep.subr.mxu0 0.0
  %206 = vmatpush1.msra.mxu0 0.0
  %207 = vmatprep.mubr.f32.mxu0 0.0
  %208 = vmatmul.mubr.f32.gmra.mrb[0].mxu0 %v134
  %v209 = vpop.f32.mrb[0].mxu0
  %v210 = vadd.f32 %v130, %v209
  %v211 = vpop.f32.mrb[0].mxu0
  %212 = vmatprep.mubr.f32.mxu0 0.0
  %213 = vmatmul.mubr.f32.gmra.mrb[0].mxu0 %v137
  %v214 = vpop.f32.mrb[0].mxu0
  %v215 = vadd.f32 %v130, %v214
  %v216 = vpop.f32.mrb[0].mxu0
  %217 = vdwg.mxu0
  %v218 = vmax.f32 %v210, 0.0
  %v219 = vmax.f32 %v215, 0.0
  %v220 = vld [vmem:[%s5] sm:$0xf]
  %v221 = vld [vmem:[%s6] sm:$0x1]
  %v223 = vlaneseq
  %v224 = vshrl.u32 %v223, 7
  %v225 = vsub.s32 0, %v224
  %v226 = vrot.slane %v221, %v225
  %vm228 = vcmask 31744
  %v230 = vsel %vm228, %v218, 0
  %v233 = vsel %vm228, %v219, 0
  %vm235 = vcmask 1043456
  %v237 = vsel %vm235, %v220, 0
  %239 = vmatprep.subr.mxu0 0.0
  %240 = vmatpush1.msra.mxu0 %v237
  %241 = vmatprep.subr.mxu0 0.0
  %242 = vmatpush1.msra.mxu0 0.0
  %243 = vmatprep.subr.mxu0 0.0
  %244 = vmatpush1.msra.mxu0 0.0
  %245 = vmatprep.subr.mxu0 0.0
  %246 = vmatpush1.msra.mxu0 0.0
  %247 = vmatprep.subr.mxu0 0.0
  %248 = vmatpush1.msra.mxu0 0.0
  %249 = vmatprep.subr.mxu0 0.0
  %250 = vmatpush1.msra.mxu0 0.0
  %251 = vmatprep.subr.mxu0 0.0
  %252 = vmatpush1.msra.mxu0 0.0
  %253 = vmatprep.subr.mxu0 0.0
  %254 = vmatpush1.msra.mxu0 0.0
  %255 = vmatprep.subr.mxu0 0.0
  %256 = vmatpush1.msra.mxu0 0.0
  %257 = vmatprep.subr.mxu0 0.0
  %258 = vmatpush1.msra.mxu0 0.0
  %259 = vmatprep.subr.mxu0 0.0
  %260 = vmatpush1.msra.mxu0 0.0
  %261 = vmatprep.subr.mxu0 0.0
  %262 = vmatpush1.msra.mxu0 0.0
  %263 = vmatprep.subr.mxu0 0.0
  %264 = vmatpush1.msra.mxu0 0.0
  %265 = vmatprep.subr.mxu0 0.0
  %266 = vmatpush1.msra.mxu0 0.0
  %267 = vmatprep.subr.mxu0 0.0
  %268 = vmatpush1.msra.mxu0 0.0
  %269 = vmatprep.subr.mxu0 0.0
  %270 = vmatpush1.msra.mxu0 0.0
  %271 = vmatprep.subr.mxu0 0.0
  %272 = vmatpush1.msra.mxu0 0.0
  %273 = vmatprep.subr.mxu0 0.0
  %274 = vmatpush1.msra.mxu0 0.0
  %275 = vmatprep.subr.mxu0 0.0
  %276 = vmatpush1.msra.mxu0 0.0
  %277 = vmatprep.subr.mxu0 0.0
  %278 = vmatpush1.msra.mxu0 0.0
  %279 = vmatprep.subr.mxu0 0.0
  %280 = vmatpush1.msra.mxu0 0.0
  %281 = vmatprep.subr.mxu0 0.0
  %282 = vmatpush1.msra.mxu0 0.0
  %283 = vmatprep.subr.mxu0 0.0
  %284 = vmatpush1.msra.mxu0 0.0
  %285 = vmatprep.subr.mxu0 0.0
  %286 = vmatpush1.msra.mxu0 0.0
  %287 = vmatprep.subr.mxu0 0.0
  %288 = vmatpush1.msra.mxu0 0.0
  %289 = vmatprep.subr.mxu0 0.0
  %290 = vmatpush1.msra.mxu0 0.0
  %291 = vmatprep.subr.mxu0 0.0
  %292 = vmatpush1.msra.mxu0 0.0
  %293 = vmatprep.subr.mxu0 0.0
  %294 = vmatpush1.msra.mxu0 0.0
  %295 = vmatprep.subr.mxu0 0.0
  %296 = vmatpush1.msra.mxu0 0.0
  %297 = vmatprep.subr.mxu0 0.0
  %298 = vmatpush1.msra.mxu0 0.0
  %299 = vmatprep.subr.mxu0 0.0
  %300 = vmatpush1.msra.mxu0 0.0
  %301 = vmatprep.subr.mxu0 0.0
  %302 = vmatpush1.msra.mxu0 0.0
  %303 = vmatprep.mubr.f32.mxu0 0.0
  %304 = vmatmul.mubr.f32.gmra.mrb[0].mxu0 %v230
  %v305 = vpop.f32.mrb[0].mxu0
  %v306 = vadd.f32 %v226, %v305
  %v307 = vpop.f32.mrb[0].mxu0
  %308 = vmatprep.mubr.f32.mxu0 0.0
  %309 = vmatmul.mubr.f32.gmra.mrb[0].mxu0 %v233
  %v310 = vpop.f32.mrb[0].mxu0
  %v311 = vadd.f32 %v226, %v310
  %v312 = vpop.f32.mrb[0].mxu0
  %313 = vdwg.mxu0
  %v314 = vxor.u32 %v306, 2147483648
  %v315 = vxor.u32 %v311, 2147483648
  %v316 = vmul.f32 %v314, 1.442695
  %v317 = vpow.pop %v316
  %v318 = vmul.f32 %v315, 1.442695
  %v319 = vpow.pop %v318
  %v320 = vadd.f32 %v317, 1.0
  %v321 = vadd.f32 %v319, 1.0
  %v322 = vrcp.pop %v320
  %v323 = vmul.f32 1.0, %v322
  %v324 = vrcp.pop %v321
  %v325 = vmul.f32 1.0, %v324
  %326 = vst.msk [vmem:[%s7] sm:$0xff] %vm228, %v323
  %327 = vst.msk [vmem:[%s7 + $0x8] sm:$0xff] %vm228, %v325
  // Predicated region
  $region30: #{tpu_custom_call.1} parent=0 // pred_check
    _
  $region31: #{tpu_custom_call.1} parent=0 // pred_check_branch
    %329 = sbr.rel (0) target = $region33
  $region32: #{tpu_custom_call.1} parent=0 // pred_region
    _
  $region33: #{tpu_custom_call.1} parent=0 // pred_fallthru
    _
  // Predicated region
  $region34: #{tpu_custom_call.1} parent=0 // pred_check
    _
  $region35: #{tpu_custom_call.1} parent=0 // pred_check_branch
    %331 = sbr.rel (0) target = $region37
  $region36: #{tpu_custom_call.1} parent=0 // pred_region
    _
  $region37: #{tpu_custom_call.1} parent=0 // pred_fallthru
    _

</llo_original>
